<compile_context>
chip_gen: v7x
topology: tpu7x:2x2x1
jax: 0.10.0
libtpu: 0.0.40
codegen_flags: <defaults>
</compile_context>

<pallas_src>
import jax
import jax.numpy as jnp
from jax import lax
from jax.experimental import pallas as pl
from jax.experimental.pallas import tpu as pltpu


# --------------------------------------------------------------------------
# Kernel 1: batch-tiled GEMM   res = x @ A + b_alpha      (MXU, bf16 -> f32)
# --------------------------------------------------------------------------
def svm_gemm_kernel(x_ref, a_ref, b_ref, res_ref):
    # (TB, Fp) bf16 @ (Fp, HIDP) bf16 -> (TB, HIDP) f32 accumulate on the MXU.
    res_ref[...] = (
        jnp.dot(x_ref[...], a_ref[...], preferred_element_type=jnp.float32)
        + b_ref[...]
    )


# --------------------------------------------------------------------------
# Kernel 2: BatchNorm1d (training mode) + softmax + classifier linear.
# Grid-free: training-mode BN couples the whole batch, and the (B, 128) f32
# slab is tiny compared to the GEMM traffic.
# TODO(synk): for extremely large B (> a few 100K rows) switch to a two-pass
# BN (per-tile sum / sum-sq accumulators) instead of one resident block.
# --------------------------------------------------------------------------
def svm_head_kernel(res_ref, gamma_ref, beta_ref, wc_ref, bc_ref, out_ref):
    res = res_ref[...]                                            # (B, HIDP) f32

    # BatchNorm1d, training mode: batch mean, biased variance, eps = 1e-5.
    mean = jnp.mean(res, axis=0, keepdims=True)                   # (1, HIDP)
    diff = res - mean
    var = jnp.mean(diff * diff, axis=0, keepdims=True)            # (1, HIDP)
    y = diff * lax.rsqrt(var + 1e-5) * gamma_ref[...] + beta_ref[...]
    # Padded HID lanes: gamma = 0, beta = -1e9  ->  y = -1e9  -> exp underflows
    # to exactly 0, so they contribute nothing to the softmax or classifier.

    # softmax over feature dim (dim=1), numerically stable; EUP reciprocal.
    m = jnp.max(y, axis=1, keepdims=True)
    e = jnp.exp(y - m)
    p = e * pl.reciprocal(jnp.sum(e, axis=1, keepdims=True), approx=True)

    # classifier linear: (B, HIDP) @ (HIDP, CLSP) + (1, CLSP)   (MXU, bf16 feed)
    out_ref[...] = (
        jnp.dot(p.astype(jnp.bfloat16), wc_ref[...],
                preferred_element_type=jnp.float32)
        + bc_ref[...]
    )


# --------------------------------------------------------------------------
# One-time parameter prep (would live in __init__): fold, pad, transpose, cast.
# Re-run this whenever x_train or W_alpha change (e.g. after a training step).
# --------------------------------------------------------------------------
def _round_up(v, m):
    return ((v + m - 1) // m) * m


def prepare_params(x_train, w_alpha, b_alpha, gamma, beta, w_cls, b_cls, feat_dim):
    F = feat_dim
    HID = w_alpha.shape[0]
    CLS = w_cls.shape[0]
    Fp = _round_up(F, 256)        # whole 256-wide MXU contraction passes (v6e/v7x)
    HIDP = _round_up(HID, 128)    # lane-dense head + full MXU output columns
    CLSP = _round_up(CLS, 128)    # lane-dense (unmasked vst) output stores

    x_tr = jnp.asarray(x_train, jnp.float32)
    w_a = jnp.asarray(w_alpha, jnp.float32)

    # Fold the two chained matmuls: A = x_train.T @ W_alpha.T / F   (F, HID),
    # computed once in f32, padded, then cast to bf16 for the MXU feed.
    A = (x_tr.T @ w_a.T) / float(F)
    A = jnp.pad(A, ((0, Fp - F), (0, HIDP - HID))).astype(jnp.bfloat16)

    ba = jnp.pad(jnp.asarray(b_alpha, jnp.float32).reshape(1, -1),
                 ((0, 0), (0, HIDP - HID)))
    ga = jnp.pad(jnp.asarray(gamma, jnp.float32).reshape(1, -1),
                 ((0, 0), (0, HIDP - HID)))                          # pad = 0
    be = jnp.pad(jnp.asarray(beta, jnp.float32).reshape(1, -1),
                 ((0, 0), (0, HIDP - HID)), constant_values=-1e9)    # pad = -1e9

    wc = jnp.pad(jnp.asarray(w_cls, jnp.float32).T,                  # (HID, CLS)
                 ((0, HIDP - HID), (0, CLSP - CLS))).astype(jnp.bfloat16)
    bc = jnp.pad(jnp.asarray(b_cls, jnp.float32).reshape(1, -1),
                 ((0, 0), (0, CLSP - CLS)))

    # TODO(synk): PyTorch training-mode BatchNorm1d also updates
    # running_mean / running_var; those statistics are not produced here.
    return {"A": A, "ba": ba, "ga": ga, "be": be, "wc": wc, "bc": bc}


# --------------------------------------------------------------------------
# Forward
# --------------------------------------------------------------------------
def svm_ovr_forward(x_nchw, params, cls_num, tb=256):
    B = x_nchw.shape[0]
    x = x_nchw.reshape(B, -1).astype(jnp.bfloat16)      # cast once, then pad once
    F = x.shape[1]
    Fp, HIDP = params["A"].shape
    CLSP = params["wc"].shape[1]

    # Batch tiling: TB rows per grid step (multiple of 8 sublanes).
    TB = max(8, (min(tb, B) // 8) * 8)
    Bp = pl.cdiv(B, TB) * TB
    x = jnp.pad(x, ((0, Bp - B), (0, Fp - F)))          # zero rows/cols are inert

    cparams = pltpu.CompilerParams(
        dimension_semantics=("parallel",),              # v7x: shard across both TCs
        vmem_limit_bytes=32 * 1024 * 1024,              # covers v5e's 16 MiB default
    )

    res = pl.pallas_call(
        svm_gemm_kernel,
        out_shape=jax.ShapeDtypeStruct((Bp, HIDP), jnp.float32),
        grid_spec=pltpu.PrefetchScalarGridSpec(
            num_scalar_prefetch=0,
            grid=(Bp // TB,),
            in_specs=[
                pl.BlockSpec((TB, Fp), lambda i: (i, 0)),   # x tile (pipelined)
                pl.BlockSpec((Fp, HIDP), lambda i: (0, 0)),  # folded weight (resident)
                pl.BlockSpec((1, HIDP), lambda i: (0, 0)),   # bias (resident)
            ],
            out_specs=pl.BlockSpec((TB, HIDP), lambda i: (i, 0)),
        ),
        compiler_params=cparams,
    )(x, params["A"], params["ba"])

    # Drop batch padding BEFORE the batch-coupled BatchNorm statistics.
    res = res[:B]

    vmem = pl.BlockSpec(memory_space=pltpu.MemorySpace.VMEM)
    out_p = pl.pallas_call(
        svm_head_kernel,
        out_shape=jax.ShapeDtypeStruct((B, CLSP), jnp.float32),
        in_specs=[vmem] * 5,
        out_specs=vmem,
        compiler_params=pltpu.CompilerParams(vmem_limit_bytes=32 * 1024 * 1024),
    )(res, params["ga"], params["be"], params["wc"], params["bc"])

    return out_p[:, :cls_num]


# --------------------------------------------------------------------------
# Pure-JAX f32 reference matching the PyTorch module math (unfused, no bf16).
# --------------------------------------------------------------------------
def _reference(x_nchw, x_train, w_alpha, b_alpha, gamma, beta, w_cls, b_cls):
    B = x_nchw.shape[0]
    x = x_nchw.reshape(B, -1).astype(jnp.float32)
    F = x.shape[1]
    k = (x @ x_train.T) / float(F)
    res = k @ w_alpha.T + b_alpha
    mean = jnp.mean(res, axis=0, keepdims=True)
    var = jnp.mean((res - mean) ** 2, axis=0, keepdims=True)
    res = (res - mean) / jnp.sqrt(var + 1e-5) * gamma + beta
    p = jax.nn.softmax(res, axis=1)
    return p @ w_cls.T + b_cls


if __name__ == "__main__":
    # Small shapes consistent with the module's forward:
    #   input image x: (B, C, H, W) -> flattened F = C*H*W
    #   synthetic "training set" self.x: (N, F)
    B, C, H, W = 48, 3, 8, 8
    F = C * H * W          # 192 (padded to 256 inside the wrapper)
    N = 128                # stand-in for the 500 SVHN samples
    HID = 64
    CLS = 10

    key = jax.random.PRNGKey(0)
    k_x, k_xtr, k_wa, k_ba, k_g, k_b, k_wc, k_bc = jax.random.split(key, 8)

    x = jax.random.normal(k_x, (B, C, H, W), jnp.float32)

    # TODO(synk): original __init__ loads SVHN .mat files for self.x; replaced
    # with deterministic synthetic data of the same role (no file I/O).
    x_train = jax.random.normal(k_xtr, (N, F), jnp.float32)
    x_train = (x_train - jnp.mean(x_train, axis=0, keepdims=True)) / (
        jnp.std(x_train, axis=0, keepdims=True) + 1e-6)

    w_alpha = jax.random.normal(k_wa, (HID, N), jnp.float32) * (1.0 / jnp.sqrt(N))
    b_alpha = jax.random.normal(k_ba, (HID,), jnp.float32) * 0.01
    gamma = 1.0 + 0.1 * jax.random.normal(k_g, (HID,), jnp.float32)
    beta = 0.1 * jax.random.normal(k_b, (HID,), jnp.float32)
    w_cls = jax.random.normal(k_wc, (CLS, HID), jnp.float32) * (1.0 / jnp.sqrt(HID))
    b_cls = jax.random.normal(k_bc, (CLS,), jnp.float32) * 0.01

    # One-time parameter prep (fold + pad + transpose + bf16 cast).
    params = prepare_params(x_train, w_alpha, b_alpha, gamma, beta,
                            w_cls, b_cls, feat_dim=F)

    # tb=16 -> 3 batch tiles on the grid (exercises the pipelined batch grid).
    fwd = jax.jit(svm_ovr_forward, static_argnums=(2, 3))
    out = fwd(x, params, CLS, 16)
    out = jax.block_until_ready(out)
    assert out.shape == (B, CLS) and out.dtype == jnp.float32

    ref = _reference(x, x_train, w_alpha, b_alpha, gamma, beta, w_cls, b_cls)
    err = jnp.max(jnp.abs(out - ref))
    assert jnp.allclose(out, ref, atol=1e-2, rtol=1e-2), f"max abs diff {err}"

    print("KERNEL_OK")
</pallas_src>

<mosaic_0001>
module attributes {stable_mosaic.version = 11 : i64} {
  func.func @svm_gemm_kernel(%arg0: i32, %arg1: memref<16x256xbf16, #tpu.memory_space<vmem>>, %arg2: memref<256x128xbf16, #tpu.memory_space<vmem>>, %arg3: memref<1x128xf32, #tpu.memory_space<vmem>>, %arg4: memref<16x128xf32, #tpu.memory_space<vmem>>) attributes {dimension_semantics = [#tpu.dimension_semantics<parallel>], iteration_bounds = array<i64: 3>, scalar_prefetch = 0 : i64, scratch_operands = 0 : i64, tpu.core_type = #tpu.core_type<tc>, window_params = [{transform_indices = @transform_0, window_bounds = array<i64: 16, 256>}, {pipeline_mode = #tpu.pipeline_mode<synchronous>, transform_indices = @transform_1, window_bounds = array<i64: 256, 128>}, {pipeline_mode = #tpu.pipeline_mode<synchronous>, transform_indices = @transform_2, window_bounds = array<i64: 1, 128>}, {transform_indices = @transform_3, window_bounds = array<i64: 16, 128>}]} {
    %c0 = arith.constant 0 : index
    %c0_0 = arith.constant 0 : index
    %0 = vector.load %arg1[%c0, %c0_0] : memref<16x256xbf16, #tpu.memory_space<vmem>>, vector<16x256xbf16>
    %c0_1 = arith.constant 0 : index
    %c0_2 = arith.constant 0 : index
    %1 = vector.load %arg2[%c0_1, %c0_2] : memref<256x128xbf16, #tpu.memory_space<vmem>>, vector<256x128xbf16>
    %cst = arith.constant dense<0.000000e+00> : vector<16x128xf32>
    %2 = tpu.matmul %0, %1, %cst {dimension_numbers = #tpu.dot_dimension_numbers<[1], [0], [0], [1], [0, 0, 1, 1], [], []>} : vector<16x256xbf16>, vector<256x128xbf16>, vector<16x128xf32> -> vector<16x128xf32>
    %c0_3 = arith.constant 0 : index
    %c0_4 = arith.constant 0 : index
    %3 = vector.load %arg3[%c0_3, %c0_4] : memref<1x128xf32, #tpu.memory_space<vmem>>, vector<1x128xf32>
    %4 = vector.broadcast %3 : vector<1x128xf32> to vector<16x128xf32>
    %5 = arith.addf %2, %4 : vector<16x128xf32>
    %c0_5 = arith.constant 0 : index
    %c0_6 = arith.constant 0 : index
    %6 = vector.load %arg4[%c0_5, %c0_6] : memref<16x128xf32, #tpu.memory_space<vmem>>, vector<16x128xf32>
    tpu.vector_store %arg4[%c0_5, %c0_6], %5 {strides = array<i32>} : memref<16x128xf32, #tpu.memory_space<vmem>>, vector<16x128xf32>,
    return
  }
  func.func @transform_0(%arg0: i32) -> (i32, i32) {
    %c0_i32 = arith.constant 0 : i32
    %c0_i32_0 = arith.constant 0 : i32
    return %arg0, %c0_i32 : i32, i32
  }
  func.func @transform_1(%arg0: i32) -> (i32, i32) {
    %c0_i32 = arith.constant 0 : i32
    %c0_i32_0 = arith.constant 0 : i32
    %c0_i32_1 = arith.constant 0 : i32
    return %c0_i32, %c0_i32_0 : i32, i32
  }
  func.func @transform_2(%arg0: i32) -> (i32, i32) {
    %c0_i32 = arith.constant 0 : i32
    %c0_i32_0 = arith.constant 0 : i32
    %c0_i32_1 = arith.constant 0 : i32
    return %c0_i32, %c0_i32_0 : i32, i32
  }
  func.func @transform_3(%arg0: i32) -> (i32, i32) {
    %c0_i32 = arith.constant 0 : i32
    %c0_i32_0 = arith.constant 0 : i32
    return %arg0, %c0_i32 : i32, i32
  }
}

module attributes {stable_mosaic.version = 11 : i64} {
  func.func @svm_head_kernel(%arg0: memref<48x128xf32, #tpu.memory_space<vmem>>, %arg1: memref<1x128xf32, #tpu.memory_space<vmem>>, %arg2: memref<1x128xf32, #tpu.memory_space<vmem>>, %arg3: memref<128x128xbf16, #tpu.memory_space<vmem>>, %arg4: memref<1x128xf32, #tpu.memory_space<vmem>>, %arg5: memref<48x128xf32, #tpu.memory_space<vmem>>) attributes {dimension_semantics = [], scalar_prefetch = 0 : i64, scratch_operands = 0 : i64, tpu.core_type = #tpu.core_type<tc>} {
    %c0 = arith.constant 0 : index
    %c0_0 = arith.constant 0 : index
    %0 = vector.load %arg0[%c0, %c0_0] : memref<48x128xf32, #tpu.memory_space<vmem>>, vector<48x128xf32>
    %cst = arith.constant dense<0.000000e+00> : vector<128xf32>
    %1 = vector.multi_reduction <add>, %0, %cst [0] : vector<48x128xf32> to vector<128xf32>
    %2 = vector.shape_cast %1 : vector<128xf32> to vector<1x128xf32>
    %cst_1 = arith.constant 4.800000e+01 : f32
    %3 = vector.broadcast %cst_1 : f32 to vector<1x128xf32>
    %4 = arith.divf %2, %3 : vector<1x128xf32>
    %5 = vector.broadcast %4 : vector<1x128xf32> to vector<48x128xf32>
    %6 = arith.subf %0, %5 : vector<48x128xf32>
    %7 = arith.mulf %6, %6 : vector<48x128xf32>
    %cst_2 = arith.constant dense<0.000000e+00> : vector<128xf32>
    %8 = vector.multi_reduction <add>, %7, %cst_2 [0] : vector<48x128xf32> to vector<128xf32>
    %9 = vector.shape_cast %8 : vector<128xf32> to vector<1x128xf32>
    %cst_3 = arith.constant 4.800000e+01 : f32
    %10 = vector.broadcast %cst_3 : f32 to vector<1x128xf32>
    %11 = arith.divf %9, %10 : vector<1x128xf32>
    %cst_4 = arith.constant 9.99999974E-6 : f32
    %12 = vector.broadcast %cst_4 : f32 to vector<1x128xf32>
    %13 = arith.addf %11, %12 : vector<1x128xf32>
    %14 = math.rsqrt %13 : vector<1x128xf32>
    %15 = vector.broadcast %14 : vector<1x128xf32> to vector<48x128xf32>
    %16 = arith.mulf %6, %15 : vector<48x128xf32>
    %c0_5 = arith.constant 0 : index
    %c0_6 = arith.constant 0 : index
    %17 = vector.load %arg1[%c0_5, %c0_6] : memref<1x128xf32, #tpu.memory_space<vmem>>, vector<1x128xf32>
    %18 = vector.broadcast %17 : vector<1x128xf32> to vector<48x128xf32>
    %19 = arith.mulf %16, %18 : vector<48x128xf32>
    %c0_7 = arith.constant 0 : index
    %c0_8 = arith.constant 0 : index
    %20 = vector.load %arg2[%c0_7, %c0_8] : memref<1x128xf32, #tpu.memory_space<vmem>>, vector<1x128xf32>
    %21 = vector.broadcast %20 : vector<1x128xf32> to vector<48x128xf32>
    %22 = arith.addf %19, %21 : vector<48x128xf32>
    %cst_9 = arith.constant dense<0xFF800000> : vector<48xf32>
    %23 = vector.multi_reduction <maximumf>, %22, %cst_9 [1] : vector<48x128xf32> to vector<48xf32>
    %24 = vector.shape_cast %23 : vector<48xf32> to vector<48x1xf32>
    %25 = vector.broadcast %24 : vector<48x1xf32> to vector<48x128xf32>
    %26 = arith.subf %22, %25 : vector<48x128xf32>
    %27 = math.exp %26 : vector<48x128xf32>
    %cst_10 = arith.constant dense<0.000000e+00> : vector<48xf32>
    %28 = vector.multi_reduction <add>, %27, %cst_10 [1] : vector<48x128xf32> to vector<48xf32>
    %29 = vector.shape_cast %28 : vector<48xf32> to vector<48x1xf32>
    %30 = tpu.reciprocal %29 {approx = true} : vector<48x1xf32> -> vector<48x1xf32>
    %31 = vector.broadcast %30 : vector<48x1xf32> to vector<48x128xf32>
    %32 = arith.mulf %27, %31 : vector<48x128xf32>
    %33 = arith.truncf %32 : vector<48x128xf32> to vector<48x128xbf16>
    %c0_11 = arith.constant 0 : index
    %c0_12 = arith.constant 0 : index
    %34 = vector.load %arg3[%c0_11, %c0_12] : memref<128x128xbf16, #tpu.memory_space<vmem>>, vector<128x128xbf16>
    %cst_13 = arith.constant dense<0.000000e+00> : vector<48x128xf32>
    %35 = tpu.matmul %33, %34, %cst_13 {dimension_numbers = #tpu.dot_dimension_numbers<[1], [0], [0], [1], [0, 0, 1, 1], [], []>} : vector<48x128xbf16>, vector<128x128xbf16>, vector<48x128xf32> -> vector<48x128xf32>
    %c0_14 = arith.constant 0 : index
    %c0_15 = arith.constant 0 : index
    %36 = vector.load %arg4[%c0_14, %c0_15] : memref<1x128xf32, #tpu.memory_space<vmem>>, vector<1x128xf32>
    %37 = vector.broadcast %36 : vector<1x128xf32> to vector<48x128xf32>
    %38 = arith.addf %35, %37 : vector<48x128xf32>
    %c0_16 = arith.constant 0 : index
    %c0_17 = arith.constant 0 : index
    %39 = vector.load %arg5[%c0_16, %c0_17] : memref<48x128xf32, #tpu.memory_space<vmem>>, vector<48x128xf32>
    tpu.vector_store %arg5[%c0_16, %c0_17], %38 {strides = array<i32>} : memref<48x128xf32, #tpu.memory_space<vmem>>, vector<48x128xf32>,
    return
  }
}

</mosaic_0001>

<llo_original>
// kernel: svm_ovr_forward.2
$region0: #{svm_ovr_forward.2}
  #allocation0 [shape = 'u32[]', space=smem, size = 0x4, offset = 0x4, fixed_abs, tag = 'smem constant byte address 0x4 - core index']
  #allocation1 [shape = 'u32[144,128]{1,0:T(1,128)}', space=vmem, size = 0x12000, scoped, tag = 'internal scratch']
  %s0 = inlined_call_operand.vmem [shape: bf16[48,256], index: 0, kind: input, shape index: {}]
  %s1 = inlined_call_operand.vmem [shape: bf16[256,128], index: 1, kind: input, shape index: {}]
  %s2 = inlined_call_operand.vmem [shape: f32[1,128], index: 2, kind: input, shape index: {}]
  %s3 = inlined_call_operand.vmem [shape: f32[48,128], index: 3, kind: output, shape index: {}]
  %s4 = sld [smem:[#allocation0]]
  $region45: #{svm_ovr_forward.2} parent=0
    _
  %s6 = ssub.s32 1, %s4
  %s7 = scalar_select 0, %s6, %s4
  loop: start=0, step=1, limit=5
  $region2: #{svm_ovr_forward.2} parent=0 // loop_pre_header
    _
  $region3: #{svm_ovr_forward.2} parent=0 // loop_header
    %s9 = sphi 0, %s13
    %p10 = scmp.ge.s32.totalorder %s9, 5
    %s19 = sphi 0, %s21
    %s22 = sphi 0, %s19
    %s23 = sphi 0, %s22
    %s39 = sphi 0, %s23
    %s43 = sphi 0, %s43
    %s45 = sphi 0, %s43
    %s46 = sphi 0, %s45
    %s60 = sphi 0, %s46
    %s64 = sphi 0, %s64
    %s66 = sphi 0, %s64
    %s67 = sphi 0, %s66
    %s81 = sphi 0, %s67
    %s87 = sphi 0, %s89
    %s90 = sphi 0, %s87
    %s91 = sphi 0, %s90
    %s107 = sphi 0, %s91
  $region4: #{svm_ovr_forward.2} parent=0 // loop_header_branch
    %12 = sbr.rel (%p10) target = $region8
  $region5: #{svm_ovr_forward.2} parent=0 // loop_body
    %s14 = ssub.s32 %s9, 1
    %s15 = ssub.s32 %s9, 2
    %s16 = sadd.s32 %s9, 1
    %s17 = ssub.s32 %s9, %s16
    %p18 = scmp.eq.s32.totalorder %s17, 0
    %s20 = sadd.s32 %s19, 1
    %s21 = scalar_select %p18, %s19, %s20
    %p24 = pneg %p18
    %p25 = scmp.eq.s32.totalorder %s9, 2
    %p26 = por %p24, %p25
    %p27 = scmp.ne.s32.totalorder %s19, %s22
    %p28 = scmp.eq.s32.totalorder %s9, 0
    %p29 = por %p27, %p28
    %p30 = scmp.ne.s32.totalorder %s19, %s22
    %p31 = scmp.eq.s32.totalorder %s14, 2
    %p32 = por %p30, %p31
    %p33 = scmp.ne.s32.totalorder %s22, %s23
    %p34 = scmp.eq.s32.totalorder %s14, 0
    %p35 = por %p33, %p34
    %p36 = scmp.ne.s32.totalorder %s22, %s23
    %p37 = scmp.eq.s32.totalorder %s15, 2
    %p38 = por %p36, %p37
    %p40 = scmp.ne.s32.totalorder %s23, %s39
    %p41 = scmp.eq.s32.totalorder %s15, 0
    %p42 = por %p40, %p41
    %s44 = sadd.s32 %s43, 1
    %p47 = scmp.eq.s32.totalorder %s9, 2
    %p48 = scmp.ne.s32.totalorder %s43, %s45
    %p49 = scmp.eq.s32.totalorder %s9, 0
    %p50 = por %p48, %p49
    %p51 = scmp.ne.s32.totalorder %s43, %s45
    %p52 = scmp.eq.s32.totalorder %s14, 2
    %p53 = por %p51, %p52
    %p54 = scmp.ne.s32.totalorder %s45, %s46
    %p55 = scmp.eq.s32.totalorder %s14, 0
    %p56 = por %p54, %p55
    %p57 = scmp.ne.s32.totalorder %s45, %s46
    %p58 = scmp.eq.s32.totalorder %s15, 2
    %p59 = por %p57, %p58
    %p61 = scmp.ne.s32.totalorder %s46, %s60
    %p62 = scmp.eq.s32.totalorder %s15, 0
    %p63 = por %p61, %p62
    %s65 = sadd.s32 %s64, 1
    %p68 = scmp.eq.s32.totalorder %s9, 2
    %p69 = scmp.ne.s32.totalorder %s64, %s66
    %p70 = scmp.eq.s32.totalorder %s9, 0
    %p71 = por %p69, %p70
    %p72 = scmp.ne.s32.totalorder %s64, %s66
    %p73 = scmp.eq.s32.totalorder %s14, 2
    %p74 = por %p72, %p73
    %p75 = scmp.ne.s32.totalorder %s66, %s67
    %p76 = scmp.eq.s32.totalorder %s14, 0
    %p77 = por %p75, %p76
    %p78 = scmp.ne.s32.totalorder %s66, %s67
    %p79 = scmp.eq.s32.totalorder %s15, 2
    %p80 = por %p78, %p79
    %p82 = scmp.ne.s32.totalorder %s67, %s81
    %p83 = scmp.eq.s32.totalorder %s15, 0
    %p84 = por %p82, %p83
    %s85 = ssub.s32 %s9, %s16
    %p86 = scmp.eq.s32.totalorder %s85, 0
    %s88 = sadd.s32 %s87, 1
    %s89 = scalar_select %p86, %s87, %s88
    %p92 = pneg %p86
    %p93 = scmp.eq.s32.totalorder %s9, 2
    %p94 = por %p92, %p93
    %p95 = scmp.ne.s32.totalorder %s87, %s90
    %p96 = scmp.eq.s32.totalorder %s9, 0
    %p97 = por %p95, %p96
    %p98 = scmp.ne.s32.totalorder %s87, %s90
    %p99 = scmp.eq.s32.totalorder %s14, 2
    %p100 = por %p98, %p99
    %p101 = scmp.ne.s32.totalorder %s90, %s91
    %p102 = scmp.eq.s32.totalorder %s14, 0
    %p103 = por %p101, %p102
    %p104 = scmp.ne.s32.totalorder %s90, %s91
    %p105 = scmp.eq.s32.totalorder %s15, 2
    %p106 = por %p104, %p105
    %p108 = scmp.ne.s32.totalorder %s91, %s107
    %p109 = scmp.eq.s32.totalorder %s15, 0
    %p110 = por %p108, %p109
    %p111 = scmp.le.s32.totalorder 1, %s9
    %p112 = scmp.lt.s32.totalorder %s9, 4
    %p113 = pnand %p111, %p112
    %p114 = pneg %p113
    // Predicated region
    $region9: #{svm_ovr_forward.2} parent=5 // pred_check
      _
    $region10: #{svm_ovr_forward.2} parent=5 // pred_check_branch
      %116 = sbr.rel (%p113) target = $region12
    $region11: #{svm_ovr_forward.2} parent=5 // pred_region
      %s117 = ssub.s32 %s9, 1
      // Predicated region
      $region13: #{svm_ovr_forward.2} parent=11 // pred_check
        %p118 = pneg %p56
      $region14: #{svm_ovr_forward.2} parent=11 // pred_check_branch
        %120 = sbr.rel (%p118) target = $region16
      $region15: #{svm_ovr_forward.2} parent=11 // pred_region
        _
      $region16: #{svm_ovr_forward.2} parent=11 // pred_fallthru
        _
      // Predicated region
      $region17: #{svm_ovr_forward.2} parent=11 // pred_check
        %p121 = pneg %p77
      $region18: #{svm_ovr_forward.2} parent=11 // pred_check_branch
        %123 = sbr.rel (%p121) target = $region20
      $region19: #{svm_ovr_forward.2} parent=11 // pred_region
        _
      $region20: #{svm_ovr_forward.2} parent=11 // pred_fallthru
        _
    $region12: #{svm_ovr_forward.2} parent=5 // pred_fallthru
      _
    %p124 = scmp.lt.s32.totalorder %s9, 3
    // Predicated region
    $region21: #{svm_ovr_forward.2} parent=5 // pred_check
      %p125 = pneg %p124
    $region22: #{svm_ovr_forward.2} parent=5 // pred_check_branch
      %127 = sbr.rel (%p125) target = $region24
    $region23: #{svm_ovr_forward.2} parent=5 // pred_region
      // Predicated region
      $region25: #{svm_ovr_forward.2} parent=23 // pred_check
        %p128 = pneg %p29
      $region26: #{svm_ovr_forward.2} parent=23 // pred_check_branch
        %130 = sbr.rel (%p128) target = $region28
      $region27: #{svm_ovr_forward.2} parent=23 // pred_region
        %s131 = smul.u32 2, %s9
        %p132 = scmp.lt.s32.totalorder %s131, 5
        %s133 = scalar_select %p132, %s131, 5
        %s134 = smul.addr %s133, 2
        %s135 = smul.addr %s134, 4
        %s136 = scalar_lea.vmem %s0, %s135
        %s137 = smul.u32 2, %s9
      $region28: #{svm_ovr_forward.2} parent=23 // pred_fallthru
        _
    $region24: #{svm_ovr_forward.2} parent=5 // pred_fallthru
      _
    %p138 = scmp.le.s32.totalorder 1, %s9
    %p139 = scmp.lt.s32.totalorder %s9, 4
    %p140 = pnand %p138, %p139
    %p141 = pneg %p140
    // Predicated region
    $region29: #{svm_ovr_forward.2} parent=5 // pred_check
      _
    $region30: #{svm_ovr_forward.2} parent=5 // pred_check_branch
      %143 = sbr.rel (%p140) target = $region32
    $region31: #{svm_ovr_forward.2} parent=5 // pred_region
      %s144 = ssub.s32 %s9, 1
      %s145 = smul.u32 2, %s14
      %p146 = scmp.lt.s32.totalorder %s145, 5
      %s147 = scalar_select %p146, %s145, 5
      %s148 = smul.addr %s147, 2
      %s149 = smul.addr %s148, 4
      %s150 = scalar_lea.vmem %s0, %s149
      %p151 = pneg %p35
      %p152 = pneg %p32
      %p153 = pneg %p56
      %p154 = pneg %p53
      %p155 = pneg %p77
      %p156 = pneg %p74
      %p157 = pneg %p103
      %p158 = pneg %p100
      %s159 = smul.u32 2, %s14
      %p160 = scmp.lt.s32.totalorder %s159, 5
      %s161 = scalar_select %p160, %s159, 5
      %s162 = smul.addr %s161, 8
      %s163 = scalar_lea.vmem %s3, %s162
      %s164 = smul.u32 2, %s14
      %p165 = scmp.lt.s32.totalorder %s164, 5
      %s166 = scalar_select %p165, %s164, 5
      %s167 = smul.addr %s166, 2
      %s168 = smul.addr %s167, 4
      %s169 = scalar_lea.vmem %s0, %s168
      %s170 = smul.u32 2, %s14
      %s171 = smul.u32 2, %s14
      %p172 = scmp.lt.s32.totalorder %s171, 5
      %s173 = scalar_select %p172, %s171, 5
      %s174 = smul.addr %s173, 8
      %s175 = scalar_lea.vmem %s3, %s174
      %s176 = smul.u32 2, %s14
      %v178 = vld [vmem:[%s169] sm:$0xff]
      %v179 = vld [vmem:[%s169 + $0x8] sm:$0xff]
      %v180 = vld [vmem:[%s1] sm:$0xf]
      %v181 = vld [vmem:[%s1 + $0x4] sm:$0xf]
      %v182 = vld [vmem:[%s1 + $0x8] sm:$0xf]
      %v183 = vld [vmem:[%s1 + $0xc] sm:$0xf]
      %v184 = vld [vmem:[%s1 + $0x10] sm:$0xf]
      %v185 = vld [vmem:[%s1 + $0x14] sm:$0xf]
      %v186 = vld [vmem:[%s1 + $0x18] sm:$0xf]
      %v187 = vld [vmem:[%s1 + $0x1c] sm:$0xf]
      %v188 = vld [vmem:[%s1 + $0x20] sm:$0xf]
      %v189 = vld [vmem:[%s1 + $0x24] sm:$0xf]
      %v190 = vld [vmem:[%s1 + $0x28] sm:$0xf]
      %v191 = vld [vmem:[%s1 + $0x2c] sm:$0xf]
      %v192 = vld [vmem:[%s1 + $0x30] sm:$0xf]
      %v193 = vld [vmem:[%s1 + $0x34] sm:$0xf]
      %v194 = vld [vmem:[%s1 + $0x38] sm:$0xf]
      %v195 = vld [vmem:[%s1 + $0x3c] sm:$0xf]
      %v196 = vld [vmem:[%s1 + $0x40] sm:$0xf]
      %v197 = vld [vmem:[%s1 + $0x44] sm:$0xf]
      %v198 = vld [vmem:[%s1 + $0x48] sm:$0xf]
      %v199 = vld [vmem:[%s1 + $0x4c] sm:$0xf]
      %v200 = vld [vmem:[%s1 + $0x50] sm:$0xf]
      %v201 = vld [vmem:[%s1 + $0x54] sm:$0xf]
      %v202 = vld [vmem:[%s1 + $0x58] sm:$0xf]
      %v203 = vld [vmem:[%s1 + $0x5c] sm:$0xf]
      %v204 = vld [vmem:[%s1 + $0x60] sm:$0xf]
      %v205 = vld [vmem:[%s1 + $0x64] sm:$0xf]
      %v206 = vld [vmem:[%s1 + $0x68] sm:$0xf]
      %v207 = vld [vmem:[%s1 + $0x6c] sm:$0xf]
      %v208 = vld [vmem:[%s1 + $0x70] sm:$0xf]
      %v209 = vld [vmem:[%s1 + $0x74] sm:$0xf]
      %v210 = vld [vmem:[%s1 + $0x78] sm:$0xf]
      %v211 = vld [vmem:[%s1 + $0x7c] sm:$0xf]
      %v212 = vld [vmem:[%s2] sm:$0x1]
      %v214 = vlaneseq
      %v215 = vshrl.u32 %v214, 7
      %v216 = vsub.s32 0, %v215
      %v217 = vrot.slane %v212, %v216
      %v221 = vunpack.c.l.b16 %v178
      %v222 = vunpack.c.h.b16 %v178
      %v223 = vunpack.c.l.b16 %v179
      %v224 = vunpack.c.h.b16 %v179
      %v225 = vpack.c.b16 %v223, %v221
      %v226 = vpack.c.b16 %v224, %v222
      %v261 = vunpack.c.l.b16 %v180
      %v262 = vunpack.c.l.b16 %v181
      %v263 = vunpack.c.l.b16 %v182
      %v264 = vunpack.c.l.b16 %v183
      %v265 = vunpack.c.l.b16 %v184
      %v266 = vunpack.c.l.b16 %v185
      %v267 = vunpack.c.l.b16 %v186
      %v268 = vunpack.c.l.b16 %v187
      %v269 = vunpack.c.l.b16 %v188
      %v270 = vunpack.c.l.b16 %v189
      %v271 = vunpack.c.l.b16 %v190
      %v272 = vunpack.c.l.b16 %v191
      %v273 = vunpack.c.l.b16 %v192
      %v274 = vunpack.c.l.b16 %v193
      %v275 = vunpack.c.l.b16 %v194
      %v276 = vunpack.c.l.b16 %v195
      %v277 = vunpack.c.l.b16 %v196
      %v278 = vunpack.c.l.b16 %v197
      %v279 = vunpack.c.l.b16 %v198
      %v280 = vunpack.c.l.b16 %v199
      %v281 = vunpack.c.l.b16 %v200
      %v282 = vunpack.c.l.b16 %v201
      %v283 = vunpack.c.l.b16 %v202
      %v284 = vunpack.c.l.b16 %v203
      %v285 = vunpack.c.l.b16 %v204
      %v286 = vunpack.c.l.b16 %v205
      %v287 = vunpack.c.l.b16 %v206
      %v288 = vunpack.c.l.b16 %v207
      %v289 = vunpack.c.l.b16 %v208
      %v290 = vunpack.c.l.b16 %v209
      %v291 = vunpack.c.l.b16 %v210
      %v292 = vunpack.c.l.b16 %v211
      %v293 = vpack.c.b16 %v262, %v261
      %v294 = vpack.c.b16 %v264, %v263
      %v295 = vpack.c.b16 %v266, %v265
      %v296 = vpack.c.b16 %v268, %v267
      %v297 = vpack.c.b16 %v270, %v269
      %v298 = vpack.c.b16 %v272, %v271
      %v299 = vpack.c.b16 %v274, %v273
      %v300 = vpack.c.b16 %v276, %v275
      %v301 = vpack.c.b16 %v278, %v277
      %v302 = vpack.c.b16 %v280, %v279
      %v303 = vpack.c.b16 %v282, %v281
      %v304 = vpack.c.b16 %v284, %v283
      %v305 = vpack.c.b16 %v286, %v285
      %v306 = vpack.c.b16 %v288, %v287
      %v307 = vpack.c.b16 %v290, %v289
      %v308 = vpack.c.b16 %v292, %v291
      %325 = vmatprep.subr.bf16.mxu0 0
      %326 = vmatpush1.bf16.msra.mxu0 %v293
      %327 = vmatprep.subr.bf16.mxu0 0
      %328 = vmatpush1.bf16.msra.mxu0 %v294
      %329 = vmatprep.subr.bf16.mxu0 0
      %330 = vmatpush1.bf16.msra.mxu0 %v295
      %331 = vmatprep.subr.bf16.mxu0 0
      %332 = vmatpush1.bf16.msra.mxu0 %v296
      %333 = vmatprep.subr.bf16.mxu0 0
      %334 = vmatpush1.bf16.msra.mxu0 %v297
      %335 = vmatprep.subr.bf16.mxu0 0
      %336 = vmatpush1.bf16.msra.mxu0 %v298
      %337 = vmatprep.subr.bf16.mxu0 0
      %338 = vmatpush1.bf16.msra.mxu0 %v299
      %339 = vmatprep.subr.bf16.mxu0 0
      %340 = vmatpush1.bf16.msra.mxu0 %v300
      %341 = vmatprep.subr.bf16.mxu0 0
      %342 = vmatpush1.bf16.msra.mxu0 %v301
      %343 = vmatprep.subr.bf16.mxu0 0
      %344 = vmatpush1.bf16.msra.mxu0 %v302
      %345 = vmatprep.subr.bf16.mxu0 0
      %346 = vmatpush1.bf16.msra.mxu0 %v303
      %347 = vmatprep.subr.bf16.mxu0 0
      %348 = vmatpush1.bf16.msra.mxu0 %v304
      %349 = vmatprep.subr.bf16.mxu0 0
      %350 = vmatpush1.bf16.msra.mxu0 %v305
      %351 = vmatprep.subr.bf16.mxu0 0
      %352 = vmatpush1.bf16.msra.mxu0 %v306
      %353 = vmatprep.subr.bf16.mxu0 0
      %354 = vmatpush1.bf16.msra.mxu0 %v307
      %355 = vmatprep.subr.bf16.mxu0 0
      %356 = vmatpush1.bf16.msra.mxu0 %v308
      %357 = vmatprep.mubr.bf16.mxu0 %v226
      %358 = vmatmul.mubr.bf16.gmra.mrb[0].mxu0 %v225
      %v359 = vpop.f32.mrb[0].mxu0
      %v360 = vadd.f32 %v217, %v359
      %v361 = vpop.f32.mrb[0].mxu0
      %v362 = vpop.f32.mrb[0].mxu0
      %v363 = vadd.f32 %v217, %v362
      %v364 = vpop.f32.mrb[0].mxu0
      %365 = vdwg.mxu0
      %366 = vst [vmem:[%s175] sm:$0xff] %v360
      %367 = vst [vmem:[%s175 + $0x8] sm:$0xff] %v363
      %s368 = smul.u32 2, %s14
      %p369 = scmp.lt.s32.totalorder %s368, 5
      %s370 = scalar_select %p369, %s368, 5
      %s371 = smul.addr %s370, 8
      %s372 = scalar_lea.vmem %s3, %s371
      // Predicated region
      $region33: #{svm_ovr_forward.2} parent=31 // pred_check
        %p373 = pneg %p100
      $region34: #{svm_ovr_forward.2} parent=31 // pred_check_branch
        %375 = sbr.rel (%p373) target = $region36
      $region35: #{svm_ovr_forward.2} parent=31 // pred_region
        %s376 = smul.u32 2, %s14
      $region36: #{svm_ovr_forward.2} parent=31 // pred_fallthru
        _
    $region32: #{svm_ovr_forward.2} parent=5 // pred_fallthru
      _
    %p377 = scmp.le.s32.totalorder 2, %s9
    // Predicated region
    $region37: #{svm_ovr_forward.2} parent=5 // pred_check
      %p378 = pneg %p377
    $region38: #{svm_ovr_forward.2} parent=5 // pred_check_branch
      %380 = sbr.rel (%p378) target = $region40
    $region39: #{svm_ovr_forward.2} parent=5 // pred_region
      %s381 = ssub.s32 %s9, 2
      // Predicated region
      $region41: #{svm_ovr_forward.2} parent=39 // pred_check
        %p382 = pneg %p106
      $region42: #{svm_ovr_forward.2} parent=39 // pred_check_branch
        %384 = sbr.rel (%p382) target = $region44
      $region43: #{svm_ovr_forward.2} parent=39 // pred_region
        %s385 = smul.u32 2, %s15
        %p386 = scmp.lt.s32.totalorder %s385, 5
        %s387 = scalar_select %p386, %s385, 5
        %s388 = smul.addr %s387, 8
        %s389 = scalar_lea.vmem %s3, %s388
      $region44: #{svm_ovr_forward.2} parent=39 // pred_fallthru
        _
    $region40: #{svm_ovr_forward.2} parent=5 // pred_fallthru
      _
  $region6: #{svm_ovr_forward.2} parent=0 // loop_footer
    %s13 = sadd.s32 1, %s9
  $region7: #{svm_ovr_forward.2} parent=0 // loop_footer_branch
    %8 = sbr.rel target = $region3
  $region8: #{svm_ovr_forward.2} parent=0 // loop_exit
    _

// kernel: svm_ovr_forward.3
$region0: #{svm_ovr_forward.3}
  #allocation0 [shape = 'u32[]', space=smem, size = 0x4, offset = 0x4, fixed_abs, tag = 'smem constant byte address 0x4 - core index']
  #allocation1 [shape = 'u32[144,128]{1,0:T(1,128)}', space=vmem, size = 0x12000, scoped, tag = 'internal scratch']
  %s0 = inlined_call_operand.vmem [shape: f32[48,128], index: 0, kind: input, shape index: {}]
  %s1 = inlined_call_operand.vmem [shape: f32[1,128], index: 1, kind: input, shape index: {}]
  %s2 = inlined_call_operand.vmem [shape: f32[1,128], index: 2, kind: input, shape index: {}]
  %s3 = inlined_call_operand.vmem [shape: bf16[128,128], index: 3, kind: input, shape index: {}]
  %s4 = inlined_call_operand.vmem [shape: f32[1,128], index: 4, kind: input, shape index: {}]
  %s5 = inlined_call_operand.vmem [shape: f32[48,128], index: 5, kind: output, shape index: {}]
  %s6 = sld [smem:[#allocation0]]
  $region30: #{svm_ovr_forward.3} parent=0
    _
  %s8 = ssub.s32 1, %s6
  %s9 = scalar_select 0, %s8, %s6
  // Predicated region
  $region2: #{svm_ovr_forward.3} parent=0 // pred_check
    _
  $region3: #{svm_ovr_forward.3} parent=0 // pred_check_branch
    %11 = sbr.rel (0) target = $region5
  $region4: #{svm_ovr_forward.3} parent=0 // pred_region
    _
  $region5: #{svm_ovr_forward.3} parent=0 // pred_fallthru
    _
  // Predicated region
  $region6: #{svm_ovr_forward.3} parent=0 // pred_check
    _
  $region7: #{svm_ovr_forward.3} parent=0 // pred_check_branch
    %13 = sbr.rel (0) target = $region9
  $region8: #{svm_ovr_forward.3} parent=0 // pred_region
    _
  $region9: #{svm_ovr_forward.3} parent=0 // pred_fallthru
    _
  // Predicated region
  $region10: #{svm_ovr_forward.3} parent=0 // pred_check
    _
  $region11: #{svm_ovr_forward.3} parent=0 // pred_check_branch
    %15 = sbr.rel (0) target = $region13
  $region12: #{svm_ovr_forward.3} parent=0 // pred_region
    _
  $region13: #{svm_ovr_forward.3} parent=0 // pred_fallthru
    _
  // Predicated region
  $region14: #{svm_ovr_forward.3} parent=0 // pred_check
    _
  $region15: #{svm_ovr_forward.3} parent=0 // pred_check_branch
    %17 = sbr.rel (0) target = $region17
  $region16: #{svm_ovr_forward.3} parent=0 // pred_region
    _
  $region17: #{svm_ovr_forward.3} parent=0 // pred_fallthru
    _
  // Predicated region
  $region18: #{svm_ovr_forward.3} parent=0 // pred_check
    _
  $region19: #{svm_ovr_forward.3} parent=0 // pred_check_branch
    %19 = sbr.rel (0) target = $region21
  $region20: #{svm_ovr_forward.3} parent=0 // pred_region
    _
  $region21: #{svm_ovr_forward.3} parent=0 // pred_fallthru
    _
  %v21 = vld [vmem:[%s0] sm:$0xff]
  %v22 = vld [vmem:[%s0 + $0x8] sm:$0xff]
  %v23 = vld [vmem:[%s0 + $0x10] sm:$0xff]
  %v24 = vld [vmem:[%s0 + $0x18] sm:$0xff]
  %v25 = vld [vmem:[%s0 + $0x20] sm:$0xff]
  %v26 = vld [vmem:[%s0 + $0x28] sm:$0xff]
  %v27 = vadd.f32 %v21, %v22
  %v28 = vadd.f32 %v27, %v23
  %v29 = vadd.f32 %v28, %v24
  %v30 = vadd.f32 %v29, %v25
  %v31 = vadd.f32 %v30, %v26
  %v32 = vrot.slane %v31, 4
  %v33 = vadd.f32 %v31, %v32
  %v34 = vrot.slane %v33, 2
  %v35 = vadd.f32 %v33, %v34
  %v36 = vrot.slane %v35, 1
  %v37 = vadd.f32 %v35, %v36
  %v38 = vrcp.pop 48.0
  %v39 = vmul.f32 %v37, %v38
  %v40 = vsub.f32 %v21, %v39
  %v41 = vsub.f32 %v22, %v39
  %v42 = vsub.f32 %v23, %v39
  %v43 = vsub.f32 %v24, %v39
  %v44 = vsub.f32 %v25, %v39
  %v45 = vsub.f32 %v26, %v39
  %v46 = vmul.f32 %v40, %v40
  %v47 = vmul.f32 %v41, %v41
  %v48 = vmul.f32 %v42, %v42
  %v49 = vmul.f32 %v43, %v43
  %v50 = vmul.f32 %v44, %v44
  %v51 = vmul.f32 %v45, %v45
  %v52 = vadd.f32 %v46, %v47
  %v53 = vadd.f32 %v52, %v48
  %v54 = vadd.f32 %v53, %v49
  %v55 = vadd.f32 %v54, %v50
  %v56 = vadd.f32 %v55, %v51
  %v57 = vrot.slane %v56, 4
  %v58 = vadd.f32 %v56, %v57
  %v59 = vrot.slane %v58, 2
  %v60 = vadd.f32 %v58, %v59
  %v61 = vrot.slane %v60, 1
  %v62 = vadd.f32 %v60, %v61
  %v63 = vmul.f32 %v62, %v38
  %v64 = vadd.f32 %v63, 1e-05
  %v65 = vrsqrt.pop %v64
  %v66 = vmul.f32 %v40, %v65
  %v67 = vmul.f32 %v41, %v65
  %v68 = vmul.f32 %v42, %v65
  %v69 = vmul.f32 %v43, %v65
  %v70 = vmul.f32 %v44, %v65
  %v71 = vmul.f32 %v45, %v65
  %v72 = vld [vmem:[%s1] sm:$0x1]
  %v74 = vlaneseq
  %v75 = vshrl.u32 %v74, 7
  %v76 = vsub.s32 0, %v75
  %v77 = vrot.slane %v72, %v76
  %v79 = vmul.f32 %v66, %v77
  %v80 = vmul.f32 %v67, %v77
  %v81 = vmul.f32 %v68, %v77
  %v82 = vmul.f32 %v69, %v77
  %v83 = vmul.f32 %v70, %v77
  %v84 = vmul.f32 %v71, %v77
  %v85 = vld [vmem:[%s2] sm:$0x1]
  %v87 = vlaneseq
  %v88 = vshrl.u32 %v87, 7
  %v89 = vsub.s32 0, %v88
  %v90 = vrot.slane %v85, %v89
  %v92 = vadd.f32 %v79, %v90
  %v93 = vadd.f32 %v80, %v90
  %v94 = vadd.f32 %v81, %v90
  %v95 = vadd.f32 %v82, %v90
  %v96 = vadd.f32 %v83, %v90
  %v97 = vadd.f32 %v84, %v90
  %98 = vmax.xlane.f32.xlu0 %v92
  %v99 = vpop.xlane.xlu0 %98
  %100 = vmax.xlane.f32.xlu0 %v93
  %v101 = vpop.xlane.xlu0 %100
  %102 = vmax.xlane.f32.xlu0 %v94
  %v103 = vpop.xlane.xlu0 %102
  %104 = vmax.xlane.f32.xlu0 %v95
  %v105 = vpop.xlane.xlu0 %104
  %106 = vmax.xlane.f32.xlu0 %v96
  %v107 = vpop.xlane.xlu0 %106
  %108 = vmax.xlane.f32.xlu0 %v97
  %v109 = vpop.xlane.xlu0 %108
  %v110 = vsub.f32 %v92, %v99
  %v111 = vsub.f32 %v93, %v101
  %v112 = vsub.f32 %v94, %v103
  %v113 = vsub.f32 %v95, %v105
  %v114 = vsub.f32 %v96, %v107
  %v115 = vsub.f32 %v97, %v109
  %v116 = vmul.f32 %v110, 1.442695
  %v117 = vpow.pop %v116
  %v118 = vmul.f32 %v111, 1.442695
  %v119 = vpow.pop %v118
  %v120 = vmul.f32 %v112, 1.442695
  %v121 = vpow.pop %v120
  %v122 = vmul.f32 %v113, 1.442695
  %v123 = vpow.pop %v122
  %v124 = vmul.f32 %v114, 1.442695
  %v125 = vpow.pop %v124
  %v126 = vmul.f32 %v115, 1.442695
  %v127 = vpow.pop %v126
  %128 = vadd.xlane.f32.xlu0 %v117
  %v129 = vpop.xlane.xlu0 %128
  %130 = vadd.xlane.f32.xlu0 %v119
  %v131 = vpop.xlane.xlu0 %130
  %132 = vadd.xlane.f32.xlu0 %v121
  %v133 = vpop.xlane.xlu0 %132
  %134 = vadd.xlane.f32.xlu0 %v123
  %v135 = vpop.xlane.xlu0 %134
  %136 = vadd.xlane.f32.xlu0 %v125
  %v137 = vpop.xlane.xlu0 %136
  %138 = vadd.xlane.f32.xlu0 %v127
  %v139 = vpop.xlane.xlu0 %138
  %v140 = vrcp.pop %v129
  %v141 = vrcp.pop %v131
  %v142 = vrcp.pop %v133
  %v143 = vrcp.pop %v135
  %v144 = vrcp.pop %v137
  %v145 = vrcp.pop %v139
  %v146 = vmul.f32 %v117, %v140
  %v147 = vmul.f32 %v119, %v141
  %v148 = vmul.f32 %v121, %v142
  %v149 = vmul.f32 %v123, %v143
  %v150 = vmul.f32 %v125, %v144
  %v151 = vmul.f32 %v127, %v145
  %v152 = vpack.c.bf16 %v147, %v146
  %v153 = vpack.c.bf16 %v149, %v148
  %v154 = vpack.c.bf16 %v151, %v150
  %v155 = vld [vmem:[%s3] sm:$0xf]
  %v156 = vld [vmem:[%s3 + $0x4] sm:$0xf]
  %v157 = vld [vmem:[%s3 + $0x8] sm:$0xf]
  %v158 = vld [vmem:[%s3 + $0xc] sm:$0xf]
  %v159 = vld [vmem:[%s3 + $0x10] sm:$0xf]
  %v160 = vld [vmem:[%s3 + $0x14] sm:$0xf]
  %v161 = vld [vmem:[%s3 + $0x18] sm:$0xf]
  %v162 = vld [vmem:[%s3 + $0x1c] sm:$0xf]
  %v163 = vld [vmem:[%s3 + $0x20] sm:$0xf]
  %v164 = vld [vmem:[%s3 + $0x24] sm:$0xf]
  %v165 = vld [vmem:[%s3 + $0x28] sm:$0xf]
  %v166 = vld [vmem:[%s3 + $0x2c] sm:$0xf]
  %v167 = vld [vmem:[%s3 + $0x30] sm:$0xf]
  %v168 = vld [vmem:[%s3 + $0x34] sm:$0xf]
  %v169 = vld [vmem:[%s3 + $0x38] sm:$0xf]
  %v170 = vld [vmem:[%s3 + $0x3c] sm:$0xf]
  %v171 = vld [vmem:[%s4] sm:$0x1]
  %v173 = vlaneseq
  %v174 = vshrl.u32 %v173, 7
  %v175 = vsub.s32 0, %v174
  %v176 = vrot.slane %v171, %v175
  %v194 = vunpack.c.l.b16 %v155
  %v195 = vunpack.c.l.b16 %v156
  %v196 = vunpack.c.l.b16 %v157
  %v197 = vunpack.c.l.b16 %v158
  %v198 = vunpack.c.l.b16 %v159
  %v199 = vunpack.c.l.b16 %v160
  %v200 = vunpack.c.l.b16 %v161
  %v201 = vunpack.c.l.b16 %v162
  %v202 = vunpack.c.l.b16 %v163
  %v203 = vunpack.c.l.b16 %v164
  %v204 = vunpack.c.l.b16 %v165
  %v205 = vunpack.c.l.b16 %v166
  %v206 = vunpack.c.l.b16 %v167
  %v207 = vunpack.c.l.b16 %v168
  %v208 = vunpack.c.l.b16 %v169
  %v209 = vunpack.c.l.b16 %v170
  %v210 = vpack.c.b16 %v195, %v194
  %v211 = vpack.c.b16 %v197, %v196
  %v212 = vpack.c.b16 %v199, %v198
  %v213 = vpack.c.b16 %v201, %v200
  %v214 = vpack.c.b16 %v203, %v202
  %v215 = vpack.c.b16 %v205, %v204
  %v216 = vpack.c.b16 %v207, %v206
  %v217 = vpack.c.b16 %v209, %v208
  %226 = vmatprep.subr.bf16.mxu0 0
  %227 = vmatpush1.bf16.msra.mxu0 %v210
  %228 = vmatprep.subr.bf16.mxu0 0
  %229 = vmatpush1.bf16.msra.mxu0 %v211
  %230 = vmatprep.subr.bf16.mxu0 0
  %231 = vmatpush1.bf16.msra.mxu0 %v212
  %232 = vmatprep.subr.bf16.mxu0 0
  %233 = vmatpush1.bf16.msra.mxu0 %v213
  %234 = vmatprep.subr.bf16.mxu0 0
  %235 = vmatpush1.bf16.msra.mxu0 %v214
  %236 = vmatprep.subr.bf16.mxu0 0
  %237 = vmatpush1.bf16.msra.mxu0 %v215
  %238 = vmatprep.subr.bf16.mxu0 0
  %239 = vmatpush1.bf16.msra.mxu0 %v216
  %240 = vmatprep.subr.bf16.mxu0 0
  %241 = vmatpush1.bf16.msra.mxu0 %v217
  %242 = vmatprep.subr.bf16.mxu0 0
  %243 = vmatpush1.bf16.msra.mxu0 0
  %244 = vmatprep.subr.bf16.mxu0 0
  %245 = vmatpush1.bf16.msra.mxu0 0
  %246 = vmatprep.subr.bf16.mxu0 0
  %247 = vmatpush1.bf16.msra.mxu0 0
  %248 = vmatprep.subr.bf16.mxu0 0
  %249 = vmatpush1.bf16.msra.mxu0 0
  %250 = vmatprep.subr.bf16.mxu0 0
  %251 = vmatpush1.bf16.msra.mxu0 0
  %252 = vmatprep.subr.bf16.mxu0 0
  %253 = vmatpush1.bf16.msra.mxu0 0
  %254 = vmatprep.subr.bf16.mxu0 0
  %255 = vmatpush1.bf16.msra.mxu0 0
  %256 = vmatprep.subr.bf16.mxu0 0
  %257 = vmatpush1.bf16.msra.mxu0 0
  %258 = vmatprep.mubr.bf16.mxu0 0
  %259 = vmatmul.mubr.bf16.gmra.mrb[0].mxu0 %v152
  %v260 = vpop.f32.mrb[0].mxu0
  %v261 = vadd.f32 %v176, %v260
  %v262 = vpop.f32.mrb[0].mxu0
  %v263 = vpop.f32.mrb[0].mxu0
  %v264 = vadd.f32 %v176, %v263
  %v265 = vpop.f32.mrb[0].mxu0
  %266 = vmatprep.mubr.bf16.mxu0 0
  %267 = vmatmul.mubr.bf16.gmra.mrb[0].mxu0 %v153
  %v268 = vpop.f32.mrb[0].mxu0
  %v269 = vadd.f32 %v176, %v268
  %v270 = vpop.f32.mrb[0].mxu0
  %v271 = vpop.f32.mrb[0].mxu0
  %v272 = vadd.f32 %v176, %v271
  %v273 = vpop.f32.mrb[0].mxu0
  %274 = vmatprep.mubr.bf16.mxu0 0
  %275 = vmatmul.mubr.bf16.gmra.mrb[0].mxu0 %v154
  %v276 = vpop.f32.mrb[0].mxu0
  %v277 = vadd.f32 %v176, %v276
  %v278 = vpop.f32.mrb[0].mxu0
  %v279 = vpop.f32.mrb[0].mxu0
  %v280 = vadd.f32 %v176, %v279
  %v281 = vpop.f32.mrb[0].mxu0
  %282 = vdwg.mxu0
  %283 = vst [vmem:[%s5] sm:$0xff] %v261
  %284 = vst [vmem:[%s5 + $0x8] sm:$0xff] %v264
  %285 = vst [vmem:[%s5 + $0x10] sm:$0xff] %v269
  %286 = vst [vmem:[%s5 + $0x18] sm:$0xff] %v272
  %287 = vst [vmem:[%s5 + $0x20] sm:$0xff] %v277
  %288 = vst [vmem:[%s5 + $0x28] sm:$0xff] %v280
  // Predicated region
  $region22: #{svm_ovr_forward.3} parent=0 // pred_check
    _
  $region23: #{svm_ovr_forward.3} parent=0 // pred_check_branch
    %290 = sbr.rel (0) target = $region25
  $region24: #{svm_ovr_forward.3} parent=0 // pred_region
    _
  $region25: #{svm_ovr_forward.3} parent=0 // pred_fallthru
    _
  // Predicated region
  $region26: #{svm_ovr_forward.3} parent=0 // pred_check
    _
  $region27: #{svm_ovr_forward.3} parent=0 // pred_check_branch
    %292 = sbr.rel (0) target = $region29
  $region28: #{svm_ovr_forward.3} parent=0 // pred_region
    _
  $region29: #{svm_ovr_forward.3} parent=0 // pred_fallthru
    _

</llo_original>
